<compile_context>
chip_gen: v5e
topology: v5e:2x2
jax: 0.10.0
libtpu: 0.0.40
codegen_flags: <defaults>
</compile_context>

<pallas_src>
import functools

import jax
import jax.numpy as jnp
from jax.experimental import pallas as pl
from jax.experimental.pallas import tpu as pltpu

PRE_EMPHASIS = 0.97  # deterministic "parameter" (exp_config.pre_emphasis)

_TARGET_BLOCK_BYTES = 4 * 1024 * 1024  # ~4 MiB per grid block (amortizes ~0.35us/step)


def _round_up(v, m):
    return ((v + m - 1) // m) * m


def _pre_emphasis_kernel(x_ref, prev_ref, o_ref, *, alpha):
    t = pl.program_id(1)
    x = x_ref[...]                                  # (BB, TT)

    # shifted[:, c] = x[:, c-1]; column 0 wraps within the tile and is fixed below.
    shifted = pltpu.roll(x, shift=1, axis=1)        # XLU slot, VPU stays free
    o_ref[...] = x - alpha * shifted

    # Boundary sample for column 0 of this tile:
    #   t == 0 -> x[:, 1]          (reflect pad)
    #   t  > 0 -> x[:, t*TT - 1]   (last sample of the previous time tile)
    # prev_ref holds these per-tile boundary samples; select column t with a masked
    # reduction over a tiny (BB, n_t) block (avoids dynamic lane slicing).
    prev_block = prev_ref[...]                      # (BB, n_t), tiny
    lane = jax.lax.broadcasted_iota(jnp.int32, prev_block.shape, 1)
    prev_col = jnp.sum(jnp.where(lane == t, prev_block, 0.0), axis=1, keepdims=True)
    o_ref[:, 0:1] = x[:, 0:1] - alpha * prev_col


def pre_emphasis(x, alpha=PRE_EMPHASIS, time_tile=262144):
    """x: (B, T) float -> pre-emphasized waveform ((B, T), or (T,) if B == 1)."""
    B, T = x.shape
    if T < 2:
        # PyTorch's reflect pad of 1 also requires T >= 2.
        raise ValueError("PreEmphasis requires T >= 2 (reflect padding of width 1)")

    itemsize = jnp.dtype(x.dtype).itemsize

    # --- time tile: lane-dense (multiple of 128), sized so the smallest batch tile
    #     still yields a ~4 MiB block when T is large.
    bb0 = B if B <= 8 else 8
    tt_target = max(128, _round_up(_TARGET_BLOCK_BYTES // (bb0 * itemsize), 128))
    TT = min(_round_up(T, 128), _round_up(time_tile, 128), tt_target)
    n_t = pl.cdiv(T, TT)

    # --- batch tile: full batch if B <= 8; otherwise a multiple of 8, grown toward the
    #     4 MiB block target (partial last batch block is masked by Pallas).
    if B <= 8:
        BB = B
    else:
        max_bb = min(B, 64, max(8, _TARGET_BLOCK_BYTES // (TT * itemsize)))
        BB = max(8, (max_bb // 8) * 8)
    n_b = pl.cdiv(B, BB)

    # Per-tile boundary samples: index 1 for tile 0 (reflect), t*TT - 1 for tile t > 0.
    boundary_idx = jnp.asarray([1] + [t * TT - 1 for t in range(1, n_t)], dtype=jnp.int32)
    prev = jnp.take(x, boundary_idx, axis=1)        # (B, n_t) — tiny gather

    kernel = functools.partial(_pre_emphasis_kernel, alpha=alpha)

    out = pl.pallas_call(
        kernel,
        out_shape=jax.ShapeDtypeStruct((B, T), x.dtype),
        grid=(n_b, n_t),
        in_specs=[
            pl.BlockSpec((BB, TT), lambda b, t: (b, t)),
            pl.BlockSpec((BB, n_t), lambda b, t: (b, 0)),
        ],
        out_specs=pl.BlockSpec((BB, TT), lambda b, t: (b, t)),
        compiler_params=pltpu.CompilerParams(
            dimension_semantics=("parallel", "parallel"),
            vmem_limit_bytes=32 * 1024 * 1024,  # blocks sized so 2x(in+out) stays << 32 MiB
        ),
        cost_estimate=pl.CostEstimate(
            flops=2 * B * T,
            transcendentals=0,
            bytes_accessed=2 * B * T * itemsize),
    )(x, prev)

    # PyTorch's .squeeze() drops the batch dim when B == 1.
    return out[0] if B == 1 else out


def _reference(x, alpha=PRE_EMPHASIS):
    padded = jnp.concatenate([x[:, 1:2], x], axis=1)          # reflect pad left by 1
    return padded[:, 1:] - alpha * padded[:, :-1]              # conv1d [-alpha, 1]


if __name__ == "__main__":
    root = jax.random.PRNGKey(0)
    k1, k2, k3, k4 = jax.random.split(root, 4)

    # Case 1: ragged T (not a multiple of the time tile) -> partial last time block, no pad/slice.
    x1 = jax.random.normal(k1, (2, 600), dtype=jnp.float32)
    y1 = jax.block_until_ready(pre_emphasis(x1, time_tile=256))
    assert y1.shape == (2, 600) and y1.dtype == jnp.float32
    assert jnp.allclose(y1, _reference(x1), atol=1e-6), "case1 mismatch vs reference"

    # Case 2: batch multiple of 8, several exact time tiles.
    x2 = jax.random.normal(k2, (8, 256), dtype=jnp.float32)
    y2 = jax.block_until_ready(pre_emphasis(x2, time_tile=128))
    assert y2.shape == (8, 256)
    assert jnp.allclose(y2, _reference(x2), atol=1e-6), "case2 mismatch vs reference"

    # Case 3: B > 8 and not a multiple of the batch tile -> partial (masked) batch block.
    x3 = jax.random.normal(k3, (12, 384), dtype=jnp.float32)
    y3 = jax.block_until_ready(pre_emphasis(x3, time_tile=128))
    assert y3.shape == (12, 384)
    assert jnp.allclose(y3, _reference(x3), atol=1e-6), "case3 mismatch vs reference"

    # Case 4: B == 1 -> matches PyTorch .squeeze() (returns a 1-D waveform).
    x4 = jax.random.normal(k4, (1, 200), dtype=jnp.float32)
    y4 = jax.block_until_ready(pre_emphasis(x4))
    assert y4.shape == (200,)
    assert jnp.allclose(y4, _reference(x4)[0], atol=1e-6), "case4 mismatch vs reference"

    print("KERNEL_OK")
</pallas_src>

<mosaic_0001>
module attributes {stable_mosaic.version = 11 : i64} {
  func.func @_pre_emphasis_kernel(%arg0: i32, %arg1: i32, %arg2: memref<2x256xf32, #tpu.memory_space<vmem>>, %arg3: memref<2x3xf32, #tpu.memory_space<vmem>>, %arg4: memref<2x256xf32, #tpu.memory_space<vmem>>) attributes {dimension_semantics = [#tpu.dimension_semantics<parallel>, #tpu.dimension_semantics<parallel>], iteration_bounds = array<i64: 1, 3>, scalar_prefetch = 0 : i64, scratch_operands = 0 : i64, tpu.core_type = #tpu.core_type<tc>, window_params = [{transform_indices = @transform_0, window_bounds = array<i64: 2, 256>}, {transform_indices = @transform_1, window_bounds = array<i64: 2, 3>}, {transform_indices = @transform_2, window_bounds = array<i64: 2, 256>}]} {
    %c0 = arith.constant 0 : index
    %c0_0 = arith.constant 0 : index
    %0 = vector.load %arg2[%c0, %c0_0] : memref<2x256xf32, #tpu.memory_space<vmem>>, vector<2x256xf32>
    %c1_i32 = arith.constant 1 : i32
    %1 = tpu.dynamic_rotate %0 by %c1_i32 dim 1 : vector<2x256xf32>, i32 -> vector<2x256xf32>
    %cst = arith.constant 9.700000e-01 : f32
    %2 = vector.broadcast %cst : f32 to vector<2x256xf32>
    %3 = arith.mulf %2, %1 : vector<2x256xf32>
    %4 = arith.subf %0, %3 : vector<2x256xf32>
    %c0_1 = arith.constant 0 : index
    %c0_2 = arith.constant 0 : index
    %5 = vector.load %arg4[%c0_1, %c0_2] : memref<2x256xf32, #tpu.memory_space<vmem>>, vector<2x256xf32>
    tpu.vector_store %arg4[%c0_1, %c0_2], %4 {strides = array<i32>} : memref<2x256xf32, #tpu.memory_space<vmem>>, vector<2x256xf32>,
    %c0_3 = arith.constant 0 : index
    %c0_4 = arith.constant 0 : index
    %6 = vector.load %arg3[%c0_3, %c0_4] : memref<2x3xf32, #tpu.memory_space<vmem>>, vector<2x3xf32>
    %7 = tpu.iota {dimensions = array<i32: 1>} : vector<2x3xi32>
    %8 = vector.broadcast %arg1 : i32 to vector<2x3xi32>
    %9 = arith.cmpi eq, %7, %8 : vector<2x3xi32>
    %cst_5 = arith.constant 0.000000e+00 : f32
    %10 = vector.broadcast %cst_5 : f32 to vector<2x3xf32>
    %11 = arith.select %9, %6, %10 : vector<2x3xi1>, vector<2x3xf32>
    %cst_6 = arith.constant dense<0.000000e+00> : vector<2xf32>
    %12 = vector.multi_reduction <add>, %11, %cst_6 [1] : vector<2x3xf32> to vector<2xf32>
    %13 = vector.shape_cast %12 : vector<2xf32> to vector<2x1xf32>
    %14 = vector.extract_strided_slice %0 {offsets = [0, 0], sizes = [2, 1], strides = [1, 1]} : vector<2x256xf32> to vector<2x1xf32>
    %cst_7 = arith.constant 9.700000e-01 : f32
    %15 = vector.broadcast %cst_7 : f32 to vector<2x1xf32>
    %16 = arith.mulf %15, %13 : vector<2x1xf32>
    %17 = arith.subf %14, %16 : vector<2x1xf32>
    %c0_8 = arith.constant 0 : index
    %c0_9 = arith.constant 0 : index
    %18 = vector.load %arg4[%c0_8, %c0_9] : memref<2x256xf32, #tpu.memory_space<vmem>>, vector<2x1xf32>
    tpu.vector_store %arg4[%c0_8, %c0_9], %17 {strides = array<i32>} : memref<2x256xf32, #tpu.memory_space<vmem>>, vector<2x1xf32>,
    return
  }
  func.func @transform_0(%arg0: i32, %arg1: i32) -> (i32, i32) {
    %c0_i32 = arith.constant 0 : i32
    return %arg0, %arg1 : i32, i32
  }
  func.func @transform_1(%arg0: i32, %arg1: i32) -> (i32, i32) {
    %c0_i32 = arith.constant 0 : i32
    %c0_i32_0 = arith.constant 0 : i32
    return %arg0, %c0_i32 : i32, i32
  }
  func.func @transform_2(%arg0: i32, %arg1: i32) -> (i32, i32) {
    %c0_i32 = arith.constant 0 : i32
    return %arg0, %arg1 : i32, i32
  }
}

</mosaic_0001>

<llo_original>
// kernel: tpu_custom_call.1
$region0: #{tpu_custom_call.1}
  #allocation0 [shape = 'u32[]', space=smem, size = 0x4, offset = 0x4, fixed_abs, tag = 'smem constant byte address 0x4 - core index']
  #allocation1 [shape = 'u32[72,128]{1,0:T(1,128)}', space=vmem, size = 0x9000, scoped, tag = 'internal scratch']
  %s0 = inlined_call_operand.hbm [shape: f32[2,600], index: 0, kind: input, shape index: {}]
  %s1 = inlined_call_operand.hbm [shape: f32[2,3], index: 1, kind: input, shape index: {}]
  %s2 = inlined_call_operand.hbm [shape: f32[2,600], index: 2, kind: output, shape index: {}]
  %s3 = sld [smem:[#allocation0]]
  $region49: #{tpu_custom_call.1} parent=0
    _
  %s5 = ssub.s32 1, %s3
  %s6 = scalar_select 0, %s5, %s3
  $region1: #{tpu_custom_call.1} parent=0
    #allocation2 [shape = 'u8[4096]{0}', space=vmem, size = 0x1000, scoped, tag = 'input window, operand 0']
    #allocation3 [shape = 's32[2]{0}', space=sflag, size = 0x8, scoped, tag = 'scoped memory for tpu_custom_call.1']
    #allocation4 [shape = 's32[2]{0}', space=sflag, size = 0x8, scoped, tag = 'scoped memory for tpu_custom_call.1']
    #allocation5 [shape = 'u8[1024]{0}', space=vmem, size = 0x400, scoped, tag = 'input window, operand 1, single buffered']
    #allocation6 [shape = 's32[1]{0}', space=sflag, size = 0x4, scoped, tag = 'scoped memory for tpu_custom_call.1']
    #allocation7 [shape = 'u8[4096]{0}', space=vmem, size = 0x1000, scoped, tag = 'output window, operand 0']
    %7 = vsyncpa [#allocation3], 0
    %s8 = scalar_lea.sflag [#allocation3], 1
    %9 = vsyncpa %s8, 0
    %10 = vsyncpa [#allocation6], 0
    %11 = vsyncpa [#allocation4], 0
    %s12 = scalar_lea.sflag [#allocation4], 1
    %13 = vsyncpa %s12, 0
    loop: start=0, step=1, limit=5
    $region2: #{tpu_custom_call.1} parent=1 // loop_pre_header
      _
    $region3: #{tpu_custom_call.1} parent=1 // loop_header
      %s15 = sphi 0, %s19
      %p16 = scmp.ge.s32.totalorder %s15, 5
      %s22 = sphi 0, %s34
      %s23 = sphi 0, %s30
      %s24 = sphi 0, %s22
      %s25 = sphi 0, %s23
      %s26 = sphi 0, %s24
      %s27 = sphi 0, %s25
      %s39 = sphi 0, %s41
      %s42 = sphi 0, %s39
      %s43 = sphi 0, %s42
      %s59 = sphi 0, %s43
      %s65 = sphi 0, %s67
      %s68 = sphi 0, %s65
      %s69 = sphi 0, %s68
      %s85 = sphi 0, %s69
      %s93 = sphi 0, %s95
      %s96 = sphi 0, %s93
      %s97 = sphi 0, %s96
      %s113 = sphi 0, %s97
    $region4: #{tpu_custom_call.1} parent=1 // loop_header_branch
      %18 = sbr.rel (%p16) target = $region8
    $region5: #{tpu_custom_call.1} parent=1 // loop_body
      %s20 = ssub.s32 %s15, 1
      %s21 = ssub.s32 %s15, 2
      %s28 = sadd.s32 1, %s23
      %p29 = scmp.ge.s32.totalorder %s28, 3
      %s30 = scalar_select %p29, 0, %s28
      %s31 = sadd.s32 1, %s22
      %s32 = scalar_select %p29, %s31, %s22
      %p33 = scmp.ge.s32.totalorder %s32, 1
      %s34 = scalar_select %p33, 0, %s32
      %s35 = ssub.s32 %s22, %s34
      %s36 = ssub.s32 %s23, %s30
      %s37 = sor.u32 %s35, %s36
      %p38 = scmp.eq.s32.totalorder %s37, 0
      %s40 = sadd.s32 %s39, 1
      %s41 = scalar_select %p38, %s39, %s40
      %p44 = pneg %p38
      %p45 = scmp.eq.s32.totalorder %s15, 2
      %p46 = por %p44, %p45
      %p47 = scmp.ne.s32.totalorder %s39, %s42
      %p48 = scmp.eq.s32.totalorder %s15, 0
      %p49 = por %p47, %p48
      %p50 = scmp.ne.s32.totalorder %s39, %s42
      %p51 = scmp.eq.s32.totalorder %s20, 2
      %p52 = por %p50, %p51
      %p53 = scmp.ne.s32.totalorder %s42, %s43
      %p54 = scmp.eq.s32.totalorder %s20, 0
      %p55 = por %p53, %p54
      %p56 = scmp.ne.s32.totalorder %s42, %s43
      %p57 = scmp.eq.s32.totalorder %s21, 2
      %p58 = por %p56, %p57
      %p60 = scmp.ne.s32.totalorder %s43, %s59
      %p61 = scmp.eq.s32.totalorder %s21, 0
      %p62 = por %p60, %p61
      %s63 = ssub.s32 %s22, %s34
      %p64 = scmp.eq.s32.totalorder %s63, 0
      %s66 = sadd.s32 %s65, 1
      %s67 = scalar_select %p64, %s65, %s66
      %p70 = pneg %p64
      %p71 = scmp.eq.s32.totalorder %s15, 2
      %p72 = por %p70, %p71
      %p73 = scmp.ne.s32.totalorder %s65, %s68
      %p74 = scmp.eq.s32.totalorder %s15, 0
      %p75 = por %p73, %p74
      %p76 = scmp.ne.s32.totalorder %s65, %s68
      %p77 = scmp.eq.s32.totalorder %s20, 2
      %p78 = por %p76, %p77
      %p79 = scmp.ne.s32.totalorder %s68, %s69
      %p80 = scmp.eq.s32.totalorder %s20, 0
      %p81 = por %p79, %p80
      %p82 = scmp.ne.s32.totalorder %s68, %s69
      %p83 = scmp.eq.s32.totalorder %s21, 2
      %p84 = por %p82, %p83
      %p86 = scmp.ne.s32.totalorder %s69, %s85
      %p87 = scmp.eq.s32.totalorder %s21, 0
      %p88 = por %p86, %p87
      %s89 = ssub.s32 %s22, %s34
      %s90 = ssub.s32 %s23, %s30
      %s91 = sor.u32 %s89, %s90
      %p92 = scmp.eq.s32.totalorder %s91, 0
      %s94 = sadd.s32 %s93, 1
      %s95 = scalar_select %p92, %s93, %s94
      %p98 = pneg %p92
      %p99 = scmp.eq.s32.totalorder %s15, 2
      %p100 = por %p98, %p99
      %p101 = scmp.ne.s32.totalorder %s93, %s96
      %p102 = scmp.eq.s32.totalorder %s15, 0
      %p103 = por %p101, %p102
      %p104 = scmp.ne.s32.totalorder %s93, %s96
      %p105 = scmp.eq.s32.totalorder %s20, 2
      %p106 = por %p104, %p105
      %p107 = scmp.ne.s32.totalorder %s96, %s97
      %p108 = scmp.eq.s32.totalorder %s20, 0
      %p109 = por %p107, %p108
      %p110 = scmp.ne.s32.totalorder %s96, %s97
      %p111 = scmp.eq.s32.totalorder %s21, 2
      %p112 = por %p110, %p111
      %p114 = scmp.ne.s32.totalorder %s97, %s113
      %p115 = scmp.eq.s32.totalorder %s21, 0
      %p116 = por %p114, %p115
      %p117 = scmp.le.s32.totalorder 1, %s15
      %p118 = scmp.lt.s32.totalorder %s15, 4
      %p119 = pnand %p117, %p118
      %p120 = pneg %p119
      // Predicated region
      $region9: #{tpu_custom_call.1} parent=5 // pred_check
        _
      $region10: #{tpu_custom_call.1} parent=5 // pred_check_branch
        %122 = sbr.rel (%p119) target = $region12
      $region11: #{tpu_custom_call.1} parent=5 // pred_region
        %s123 = ssub.s32 %s15, 1
        // Predicated region
        $region13: #{tpu_custom_call.1} parent=11 // pred_check
          %p124 = pneg %p81
        $region14: #{tpu_custom_call.1} parent=11 // pred_check_branch
          %126 = sbr.rel (%p124) target = $region16
        $region15: #{tpu_custom_call.1} parent=11 // pred_region
          %128 = vsyncadd [#allocation6], 0
          %s129 = smul.addr %s24, 2
          %s130 = scalar_lea.hbm %s1, %s129
          %s132 = sshll.u32 %s130, 4
          %s133 = int_to_ptr.hbm [resolvable:$true] %s132
          %s134 = sshll.u32 [#allocation5], 4
          %s135 = int_to_ptr.vmem [resolvable:$true] %s134
          %137 = dma.hbm_to_vmem [thread:$0]  %s133, 32, %s135, [#allocation6]
        $region16: #{tpu_custom_call.1} parent=11 // pred_fallthru
          _
      $region12: #{tpu_custom_call.1} parent=5 // pred_fallthru
        _
      %p138 = scmp.lt.s32.totalorder %s15, 3
      // Predicated region
      $region17: #{tpu_custom_call.1} parent=5 // pred_check
        %p139 = pneg %p138
      $region18: #{tpu_custom_call.1} parent=5 // pred_check_branch
        %141 = sbr.rel (%p139) target = $region20
      $region19: #{tpu_custom_call.1} parent=5 // pred_region
        // Predicated region
        $region21: #{tpu_custom_call.1} parent=19 // pred_check
          %p142 = pneg %p49
        $region22: #{tpu_custom_call.1} parent=19 // pred_check_branch
          %144 = sbr.rel (%p142) target = $region24
        $region23: #{tpu_custom_call.1} parent=19 // pred_region
          %s145 = sand.u32 %s39, 1
          %s146 = scalar_lea.sflag [#allocation3], %s145
          %s147 = sand.u32 %s39, 1
          %s148 = smul.addr %s147, 4
          %s149 = scalar_lea.vmem [#allocation2], %s148
          %s150 = smul.u32 2, %s23
          %s151 = ssub.s32 5, %s150
          %p152 = scmp.lt.s32.totalorder %s151, 2
          %s153 = scalar_select %p152, %s151, 2
          %s154 = smul.u32 2, %s153
          %s155 = ssub.s32 4, %s154
          %s156 = sshll.u32 %s155, 4
          %157 = vsyncadd %s146, %s156
          %p158 = scmp.ne.s32.totalorder 0, %s154
          %s159 = smul.addr %s22, 5
          %s160 = sadd.s32 %s150, %s159
          %s161 = smul.addr %s160, 2
          %s162 = scalar_lea.hbm %s0, %s161
          %s163 = smul.u32 %s153, 2
          %s164 = sshll.u32 %s163, 4
          %s165 = sshll.u32 %s162, 4
          %s166 = int_to_ptr.hbm [resolvable:$true] %s165
          %s167 = sshll.u32 %s149, 4
          %s168 = int_to_ptr.vmem [resolvable:$true] %s167
          %170 = dma.hbm_to_vmem [thread:$0]  (%p158), %s166, %s164, %s168, %s146
        $region24: #{tpu_custom_call.1} parent=19 // pred_fallthru
          _
      $region20: #{tpu_custom_call.1} parent=5 // pred_fallthru
        _
      %p171 = scmp.le.s32.totalorder 1, %s15
      %p172 = scmp.lt.s32.totalorder %s15, 4
      %p173 = pnand %p171, %p172
      %p174 = pneg %p173
      // Predicated region
      $region25: #{tpu_custom_call.1} parent=5 // pred_check
        _
      $region26: #{tpu_custom_call.1} parent=5 // pred_check_branch
        %176 = sbr.rel (%p173) target = $region28
      $region27: #{tpu_custom_call.1} parent=5 // pred_region
        %s177 = ssub.s32 %s15, 1
        %s178 = sand.u32 %s42, 1
        %s179 = scalar_lea.sflag [#allocation3], %s178
        %s180 = sand.u32 %s42, 1
        %s181 = smul.addr %s180, 4
        %s182 = scalar_lea.vmem [#allocation2], %s181
        // Predicated region
        $region29: #{tpu_custom_call.1} parent=27 // pred_check
          %p183 = pneg %p55
        $region30: #{tpu_custom_call.1} parent=27 // pred_check_branch
          %185 = sbr.rel (%p183) target = $region32
        $region31: #{tpu_custom_call.1} parent=27 // pred_region
          %187 = dma.done %s179, 64
        $region32: #{tpu_custom_call.1} parent=27 // pred_fallthru
          _
        // Predicated region
        $region33: #{tpu_custom_call.1} parent=27 // pred_check
          %p188 = pneg %p81
        $region34: #{tpu_custom_call.1} parent=27 // pred_check_branch
          %190 = sbr.rel (%p188) target = $region36
        $region35: #{tpu_custom_call.1} parent=27 // pred_region
          %192 = dma.done [#allocation6], 32
        $region36: #{tpu_custom_call.1} parent=27 // pred_fallthru
          _
        %s193 = sand.u32 %s42, 1
        %s194 = scalar_lea.sflag [#allocation3], %s193
        %s195 = sand.u32 %s42, 1
        %s196 = smul.addr %s195, 4
        %s197 = scalar_lea.vmem [#allocation2], %s196
        %p198 = pneg %p55
        %p199 = pneg %p52
        %p200 = pneg %p81
        %p201 = pneg %p78
        %p202 = pneg %p109
        %p203 = pneg %p106
        %s204 = sand.u32 %s96, 1
        %s205 = scalar_lea.sflag [#allocation4], %s204
        %s206 = sand.u32 %s96, 1
        %s207 = smul.addr %s206, 4
        %s208 = scalar_lea.vmem [#allocation7], %s207
        %s209 = smul.u32 2, %s25
        %s210 = ssub.s32 5, %s209
        %p211 = scmp.lt.s32.totalorder %s210, 2
        %s212 = scalar_select %p211, %s210, 2
        %s213 = smul.u32 2, %s212
        %s214 = smul.u32 2, %s25
        %s215 = ssub.s32 5, %s214
        %p216 = scmp.lt.s32.totalorder %s215, 2
        %s217 = scalar_select %p216, %s215, 2
        %s218 = smul.u32 2, %s217
        %v219 = vld [vmem:[%s182] sm:$0xf]
        %221 = vst [vmem:[#allocation1] ss:$4 sm:$0xff] %v219
        %v222 = vld.sshfl [vmem:[#allocation1] sm:$0xff pattern:$0x73625140]
        %v223 = vld.sshfl [vmem:[#allocation1 + $0x8] sm:$0xff pattern:$0x73625140]
        %226 = vrot.lane.b32.xlu0 %v222, 1
        %v227 = vpop.permute.xlu0 %226
        %228 = vrot.lane.b32.xlu0 %v223, 1
        %v229 = vpop.permute.xlu0 %228
        %v230 = vlaneseq
        %v231 = vand.u32 %v230, 127
        %vm232 = vcmp.lt.s32.totalorder %v231, 1
        %v233 = vsel %vm232, %v227, %v229
        %v234 = vsel %vm232, %v229, %v227
        %v235 = vmul.f32 %v234, 0.97
        %v236 = vmul.f32 %v233, 0.97
        %v239 = vrot.slane %v236, 6
        %vm240 = vcmask 1041408
        %v241 = vsel %vm240, %v235, %v239
        %v243 = vsub.f32 %v219, %v241
        %244 = vst [vmem:[%s208] sm:$0xf] %v243
        %v245 = vld [vmem:[#allocation5] sm:$0x3]
        %v246 = vstv %s25
        %vm247 = vcmp.eq.s32.totalorder %v231, %v246
        %v248 = vsel %vm247, %v245, 0.0
        %vm249 = vcmask 17408
        %v250 = vsel %vm249, %v248, 0.0
        %251 = vadd.xlane.f32.xlu0 %v250
        %v252 = vpop.xlane.xlu0 %251
        %v253 = vmul.f32 %v252, 0.97
        %v254 = vsub.f32 %v219, %v253
        %vm255 = vcmask 1024
        %256 = vst.msk [vmem:[%s208] sm:$0x3] %vm255, %v254
        %s257 = sand.u32 %s96, 1
        %s258 = scalar_lea.sflag [#allocation4], %s257
        %s259 = sand.u32 %s96, 1
        %s260 = smul.addr %s259, 4
        %s261 = scalar_lea.vmem [#allocation7], %s260
        // Predicated region
        $region37: #{tpu_custom_call.1} parent=27 // pred_check
          %p262 = pneg %p106
        $region38: #{tpu_custom_call.1} parent=27 // pred_check_branch
          %264 = sbr.rel (%p262) target = $region40
        $region39: #{tpu_custom_call.1} parent=27 // pred_region
          %s265 = smul.u32 2, %s25
          %s266 = ssub.s32 5, %s265
          %p267 = scmp.lt.s32.totalorder %s266, 2
          %s268 = scalar_select %p267, %s266, 2
          %s269 = smul.u32 2, %s268
          %s270 = ssub.s32 4, %s269
          %s271 = sshll.u32 %s270, 4
          %272 = vsyncadd %s258, %s271
          %p273 = scmp.ne.s32.totalorder 0, %s269
          %s274 = smul.addr %s24, 5
          %s275 = sadd.s32 %s265, %s274
          %s276 = smul.addr %s275, 2
          %s277 = scalar_lea.hbm %s2, %s276
          %s278 = smul.u32 %s268, 2
          %s279 = sshll.u32 %s278, 4
          %s280 = sshll.u32 %s261, 4
          %s281 = int_to_ptr.vmem [resolvable:$true] %s280
          %s282 = sshll.u32 %s277, 4
          %s283 = int_to_ptr.hbm [resolvable:$true] %s282
          %285 = dma.vmem_to_hbm [thread:$0]  (%p273), %s281, %s279, %s283, %s258
        $region40: #{tpu_custom_call.1} parent=27 // pred_fallthru
          _
      $region28: #{tpu_custom_call.1} parent=5 // pred_fallthru
        _
      %p286 = scmp.le.s32.totalorder 2, %s15
      // Predicated region
      $region41: #{tpu_custom_call.1} parent=5 // pred_check
        %p287 = pneg %p286
      $region42: #{tpu_custom_call.1} parent=5 // pred_check_branch
        %289 = sbr.rel (%p287) target = $region44
      $region43: #{tpu_custom_call.1} parent=5 // pred_region
        %s290 = ssub.s32 %s15, 2
        // Predicated region
        $region45: #{tpu_custom_call.1} parent=43 // pred_check
          %p291 = pneg %p112
        $region46: #{tpu_custom_call.1} parent=43 // pred_check_branch
          %293 = sbr.rel (%p291) target = $region48
        $region47: #{tpu_custom_call.1} parent=43 // pred_region
          %s294 = sand.u32 %s97, 1
          %s295 = scalar_lea.sflag [#allocation4], %s294
          %s296 = sand.u32 %s97, 1
          %s297 = smul.addr %s296, 4
          %s298 = scalar_lea.vmem [#allocation7], %s297
          %300 = dma.done %s295, 64
        $region48: #{tpu_custom_call.1} parent=43 // pred_fallthru
          _
      $region44: #{tpu_custom_call.1} parent=5 // pred_fallthru
        _
    $region6: #{tpu_custom_call.1} parent=1 // loop_footer
      %s19 = sadd.s32 1, %s15
    $region7: #{tpu_custom_call.1} parent=1 // loop_footer_branch
      %14 = sbr.rel target = $region3
    $region8: #{tpu_custom_call.1} parent=1 // loop_exit
      _
    %301 = vsyncpa [#allocation3], 1
    %s302 = scalar_lea.sflag [#allocation3], 1
    %303 = vsyncpa %s302, 1
    %304 = vsyncpa [#allocation6], 1
    %305 = vsyncpa [#allocation4], 1
    %s306 = scalar_lea.sflag [#allocation4], 1
    %307 = vsyncpa %s306, 1

</llo_original>
